<compile_context>
chip_gen: v5e
topology: v5e:2x2
jax: 0.10.0
libtpu: 0.0.40
codegen_flags: <defaults>
</compile_context>

<pallas_src>
import functools

import jax
import jax.numpy as jnp
from jax.experimental import pallas as pl
from jax.experimental.pallas import tpu as pltpu

_LANE = 128  # lane-dense padded feature width


def _pad_lanes(x, lane=_LANE):
    """Zero-pad the last (lane) dim of x up to `lane`."""
    pad = lane - x.shape[-1]
    if pad <= 0:
        return x
    return jnp.pad(x, [(0, 0)] * (x.ndim - 1) + [(0, pad)])


# ----------------------------------------------------------------------------
# Fused Pallas kernel: (pool + project + prompt-bias + L2-norm) for BOTH paths
# ----------------------------------------------------------------------------

def _slinet_fused_kernel(B, N, T, P,
                         patches_ref,   # (B*N, patch_dim)  image patches (im2patch)
                         text_ref,      # (B*T, Dt)         text token embeddings
                         w_img_ref,     # (patch_dim, 128)  conv1_w @ visual_proj (lane-padded)
                         w_txt_ref,     # (Dt, 128)         text_proj (lane-padded)
                         b_img_ref,     # (1, 128)          pooled visual-prompt projection
                         b_txt_ref,     # (1, 128)          pooled textual-prompt projection
                         img_out_ref,   # (B, 128)          L2-normalized (padded lanes = 0)
                         txt_out_ref):  # (B, 128)
    def encode(x_ref, rows_per_b, w_ref, b_ref, out_ref):
        # Mean-pool the per-batch token rows via an MXU contraction with a
        # block-diagonal selector (keeps the reduction off the XLU).
        inv = jnp.float32(1.0 / (rows_per_b + P))
        rows = B * rows_per_b
        row = jax.lax.broadcasted_iota(jnp.int32, (B, rows), 0)
        col = jax.lax.broadcasted_iota(jnp.int32, (B, rows), 1)
        lo = row * rows_per_b
        sel = jnp.where((col >= lo) & (col < lo + rows_per_b), inv, 0.0)
        pooled = jnp.dot(sel, x_ref[...],
                         preferred_element_type=jnp.float32)          # (B, D)
        feat = jnp.dot(pooled, w_ref[...],
                       preferred_element_type=jnp.float32) + b_ref[...]  # (B, 128)
        # Padded lanes of w/b are zero -> feat padded lanes are zero, so the
        # L2 norm over 128 lanes equals the norm over the true feature dim.
        sq = jnp.sum(feat * feat, axis=-1, keepdims=True)
        out_ref[...] = feat * jax.lax.rsqrt(sq + 1e-12)

    encode(patches_ref, N, w_img_ref, b_img_ref, img_out_ref)
    encode(text_ref, T, w_txt_ref, b_txt_ref, txt_out_ref)


def fused_encode(patches2d, text2d, w_img, w_txt, b_img, b_txt, *, B, N, T, P):
    """One pallas_call computing both L2-normalized feature sets (lane-padded)."""
    kernel = functools.partial(_slinet_fused_kernel, B, N, T, P)
    vmem = pl.BlockSpec(memory_space=pltpu.MemorySpace.VMEM)
    return pl.pallas_call(
        kernel,
        out_shape=(jax.ShapeDtypeStruct((B, _LANE), jnp.float32),
                   jax.ShapeDtypeStruct((B, _LANE), jnp.float32)),
        in_specs=[vmem] * 6,
        out_specs=(vmem, vmem),
    )(patches2d, text2d, w_img, w_txt, b_img, b_txt)


# ----------------------------------------------------------------------------
# SliNet (synthetic params, Pallas-backed forward)
# ----------------------------------------------------------------------------

class SliNetPallas:
    """Minimal JAX/Pallas analogue of SliNet.forward."""

    def __init__(
        self,
        key,
        *,
        in_chans=3,
        img_size=16,
        patch_size=8,
        visual_dim=64,
        textual_dim=48,
        feature_dim=32,
        prompt_length=4,
        prompt_depth=1,
        vocab_size=100,
        total_sessions=2,
    ):
        self.in_chans = in_chans
        self.img_size = img_size
        self.patch_size = patch_size
        self.visual_dim = visual_dim
        self.textual_dim = textual_dim
        self.feature_dim = feature_dim
        self.prompt_length = prompt_length
        self.prompt_depth = prompt_depth
        self.numtask = 1  # current task (mirrors self.numtask in the reference)

        ks = jax.random.split(key, 6 + 2 * total_sessions)
        patch_dim = in_chans * patch_size * patch_size
        self.patch_dim = patch_dim
        self.n_patches = (img_size // patch_size) ** 2

        # --- canonical (synthetic) parameters --------------------------------
        # image_encoder.conv1 (patch embedding) expressed as (patch_dim, Dv)
        self.conv1_w = 0.02 * jax.random.normal(
            ks[0], (patch_dim, visual_dim), jnp.float32)
        # image_encoder.proj
        self.visual_proj = 0.02 * jax.random.normal(
            ks[1], (visual_dim, feature_dim), jnp.float32)
        # text_encoder: token embedding + text projection
        self.token_embedding = 0.02 * jax.random.normal(
            ks[2], (vocab_size, textual_dim), jnp.float32)
        self.text_proj = 0.02 * jax.random.normal(
            ks[3], (textual_dim, feature_dim), jnp.float32)
        self.logit_scale = jnp.float32(jnp.log(1.0 / 0.07))

        # prompt pool: per-session (visual_prompt, textual_prompt),
        # shapes (1, depth, prompt_length, dim) — mirrors NormalPrompt
        self.prompts = []
        for s in range(total_sessions):
            vp = 0.02 * jax.random.normal(
                ks[6 + 2 * s],
                (1, prompt_depth, prompt_length, visual_dim), jnp.float32)
            tp = 0.02 * jax.random.normal(
                ks[7 + 2 * s],
                (1, prompt_depth, prompt_length, textual_dim), jnp.float32)
            self.prompts.append((vp, tp))

        # --- precomputed fused kernel operands (lane-padded to 128) ----------
        # Pre-composed patch-embed ∘ output-projection weight (valid only while
        # the CLIP transformer blocks are a linear approximation).
        self.w_img_pad = _pad_lanes(self.conv1_w @ self.visual_proj)   # (patch_dim, 128)
        self.w_txt_pad = _pad_lanes(self.text_proj)                    # (Dt, 128)
        # Per-session pooled prompt contributions, already projected: (1, 128).
        self._vp_feat = []
        self._tp_feat = []
        for vp, tp in self.prompts:
            vpf = jnp.sum(vp[0, 0], axis=0) @ self.visual_proj         # (F,)
            tpf = jnp.sum(tp[0, 0], axis=0) @ self.text_proj           # (F,)
            self._vp_feat.append(_pad_lanes(vpf[None, :]))
            self._tp_feat.append(_pad_lanes(tpf[None, :]))

    # --- glue ----------------------------------------------------------------
    def _im2patch(self, image):
        """NCHW image -> (B, num_patches, C*p*p), matching conv2d(stride=p)."""
        B, C, H, W = image.shape
        p = self.patch_size
        x = image.reshape(B, C, H // p, p, W // p, p)
        x = jnp.transpose(x, (0, 2, 4, 1, 3, 5))  # (B, H/p, W/p, C, p, p)
        return x.reshape(B, (H // p) * (W // p), C * p * p)

    # --- forward -------------------------------------------------------------
    def forward(self, image, text):
        bs = image.shape[0]
        visual_prompt, textual_prompt = self.prompts[self.numtask - 1]

        # Returned expanded prompts (contract of the reference forward); the
        # kernel itself never sees the broadcast copies.
        visual_prompt_exp = jnp.broadcast_to(
            visual_prompt, (bs,) + visual_prompt.shape[1:])
        textual_prompt_exp = jnp.broadcast_to(
            textual_prompt, (bs,) + textual_prompt.shape[1:])

        # glue: patch extraction (layout only) and token-id embedding gather
        patches = self._im2patch(image)                                # (B, N, Cpp)
        B, N, Kpd = patches.shape
        text_tok = jnp.take(self.token_embedding, text, axis=0)       # (B, T, Dt)
        T = text_tok.shape[1]
        P = self.prompt_length

        # Prompt contributions carry the same 1/(n_tokens) mean-pool scale as
        # the in-kernel selector.
        b_img = self._vp_feat[self.numtask - 1] * (1.0 / (N + P))
        b_txt = self._tp_feat[self.numtask - 1] * (1.0 / (T + P))

        img_pad, txt_pad = fused_encode(
            patches.reshape(B * N, Kpd),
            text_tok.reshape(B * T, self.textual_dim),
            self.w_img_pad, self.w_txt_pad, b_img, b_txt,
            B=B, N=N, T=T, P=P)

        image_features = img_pad[:, :self.feature_dim]
        text_features = txt_pad[:, :self.feature_dim]
        return image_features, text_features, visual_prompt_exp, textual_prompt_exp


# ----------------------------------------------------------------------------
# pure-JAX reference (un-fused, un-padded) for correctness checking
# ----------------------------------------------------------------------------

def _reference_forward(model, image, text):
    vp, tp = model.prompts[model.numtask - 1]
    P = model.prompt_length

    patches = model._im2patch(image)                                   # (B, N, Kpd)
    _, N, _ = patches.shape
    tok = patches @ model.conv1_w                                      # (B, N, Dv)
    pooled_i = (tok.sum(1) + vp[0, 0].sum(0)) / (N + P)
    img_f = pooled_i @ model.visual_proj
    img_f = img_f / jnp.linalg.norm(img_f, axis=-1, keepdims=True)

    ttok = jnp.take(model.token_embedding, text, axis=0)               # (B, T, Dt)
    T = ttok.shape[1]
    pooled_t = (ttok.sum(1) + tp[0, 0].sum(0)) / (T + P)
    txt_f = pooled_t @ model.text_proj
    txt_f = txt_f / jnp.linalg.norm(txt_f, axis=-1, keepdims=True)
    return img_f, txt_f


# ----------------------------------------------------------------------------
# main
# ----------------------------------------------------------------------------

if __name__ == "__main__":
    key = jax.random.PRNGKey(0)
    k_model, k_img, k_txt = jax.random.split(key, 3)

    model = SliNetPallas(k_model)

    B, C, H, W = 2, 3, 16, 16
    T = 8
    image = jax.random.normal(k_img, (B, C, H, W), jnp.float32)
    text = jax.random.randint(k_txt, (B, T), 0, 100, jnp.int32)

    img_f, txt_f, vp_exp, tp_exp = model.forward(image, text)
    jax.block_until_ready((img_f, txt_f, vp_exp, tp_exp))

    # shape contract
    assert img_f.shape == (B, model.feature_dim)
    assert txt_f.shape == (B, model.feature_dim)
    assert vp_exp.shape == (B, model.prompt_depth, model.prompt_length, model.visual_dim)
    assert tp_exp.shape == (B, model.prompt_depth, model.prompt_length, model.textual_dim)

    # features are unit-norm
    assert jnp.allclose(jnp.linalg.norm(img_f, axis=-1), 1.0, atol=1e-4)
    assert jnp.allclose(jnp.linalg.norm(txt_f, axis=-1), 1.0, atol=1e-4)

    # matches the un-fused pure-JAX reference
    ref_img, ref_txt = _reference_forward(model, image, text)
    assert jnp.allclose(img_f, ref_img, atol=1e-4)
    assert jnp.allclose(txt_f, ref_txt, atol=1e-4)

    print("KERNEL_OK")
</pallas_src>

<mosaic_0001>
module attributes {stable_mosaic.version = 11 : i64} {
  func.func @_slinet_fused_kernel(%arg0: memref<8x192xf32, #tpu.memory_space<vmem>>, %arg1: memref<16x48xf32, #tpu.memory_space<vmem>>, %arg2: memref<192x128xf32, #tpu.memory_space<vmem>>, %arg3: memref<48x128xf32, #tpu.memory_space<vmem>>, %arg4: memref<1x128xf32, #tpu.memory_space<vmem>>, %arg5: memref<1x128xf32, #tpu.memory_space<vmem>>, %arg6: memref<2x128xf32, #tpu.memory_space<vmem>>, %arg7: memref<2x128xf32, #tpu.memory_space<vmem>>) attributes {dimension_semantics = [], scalar_prefetch = 0 : i64, scratch_operands = 0 : i64, tpu.core_type = #tpu.core_type<tc>} {
    %0 = tpu.iota {dimensions = array<i32: 0>} : vector<2x8xi32>
    %1 = tpu.iota {dimensions = array<i32: 1>} : vector<2x8xi32>
    %c4_i32 = arith.constant 4 : i32
    %2 = vector.broadcast %c4_i32 : i32 to vector<2x8xi32>
    %3 = arith.muli %0, %2 : vector<2x8xi32>
    %4 = arith.cmpi sge, %1, %3 : vector<2x8xi32>
    %c4_i32_0 = arith.constant 4 : i32
    %5 = vector.broadcast %c4_i32_0 : i32 to vector<2x8xi32>
    %6 = arith.addi %3, %5 : vector<2x8xi32>
    %7 = arith.cmpi slt, %1, %6 : vector<2x8xi32>
    %8 = arith.andi %4, %7 : vector<2x8xi1>
    %cst = arith.constant 1.250000e-01 : f32
    %cst_1 = arith.constant 0.000000e+00 : f32
    %9 = vector.broadcast %cst : f32 to vector<2x8xf32>
    %10 = vector.broadcast %cst_1 : f32 to vector<2x8xf32>
    %11 = arith.select %8, %9, %10 : vector<2x8xi1>, vector<2x8xf32>
    %c0 = arith.constant 0 : index
    %c0_2 = arith.constant 0 : index
    %12 = vector.load %arg0[%c0, %c0_2] : memref<8x192xf32, #tpu.memory_space<vmem>>, vector<8x192xf32>
    %cst_3 = arith.constant dense<0.000000e+00> : vector<2x192xf32>
    %13 = tpu.matmul %11, %12, %cst_3 {dimension_numbers = #tpu.dot_dimension_numbers<[1], [0], [0], [1], [0, 0, 1, 1], [], []>} : vector<2x8xf32>, vector<8x192xf32>, vector<2x192xf32> -> vector<2x192xf32>
    %c0_4 = arith.constant 0 : index
    %c0_5 = arith.constant 0 : index
    %14 = vector.load %arg2[%c0_4, %c0_5] : memref<192x128xf32, #tpu.memory_space<vmem>>, vector<192x128xf32>
    %cst_6 = arith.constant dense<0.000000e+00> : vector<2x128xf32>
    %15 = tpu.matmul %13, %14, %cst_6 {dimension_numbers = #tpu.dot_dimension_numbers<[1], [0], [0], [1], [0, 0, 1, 1], [], []>} : vector<2x192xf32>, vector<192x128xf32>, vector<2x128xf32> -> vector<2x128xf32>
    %c0_7 = arith.constant 0 : index
    %c0_8 = arith.constant 0 : index
    %16 = vector.load %arg4[%c0_7, %c0_8] : memref<1x128xf32, #tpu.memory_space<vmem>>, vector<1x128xf32>
    %17 = vector.broadcast %16 : vector<1x128xf32> to vector<2x128xf32>
    %18 = arith.addf %15, %17 : vector<2x128xf32>
    %19 = arith.mulf %18, %18 : vector<2x128xf32>
    %cst_9 = arith.constant dense<0.000000e+00> : vector<2xf32>
    %20 = vector.multi_reduction <add>, %19, %cst_9 [1] : vector<2x128xf32> to vector<2xf32>
    %21 = vector.shape_cast %20 : vector<2xf32> to vector<2x1xf32>
    %cst_10 = arith.constant 9.99999996E-13 : f32
    %22 = vector.broadcast %cst_10 : f32 to vector<2x1xf32>
    %23 = arith.addf %21, %22 : vector<2x1xf32>
    %24 = math.rsqrt %23 : vector<2x1xf32>
    %25 = vector.broadcast %24 : vector<2x1xf32> to vector<2x128xf32>
    %26 = arith.mulf %18, %25 : vector<2x128xf32>
    %c0_11 = arith.constant 0 : index
    %c0_12 = arith.constant 0 : index
    %27 = vector.load %arg6[%c0_11, %c0_12] : memref<2x128xf32, #tpu.memory_space<vmem>>, vector<2x128xf32>
    tpu.vector_store %arg6[%c0_11, %c0_12], %26 {strides = array<i32>} : memref<2x128xf32, #tpu.memory_space<vmem>>, vector<2x128xf32>,
    %28 = tpu.iota {dimensions = array<i32: 0>} : vector<2x16xi32>
    %29 = tpu.iota {dimensions = array<i32: 1>} : vector<2x16xi32>
    %c8_i32 = arith.constant 8 : i32
    %30 = vector.broadcast %c8_i32 : i32 to vector<2x16xi32>
    %31 = arith.muli %28, %30 : vector<2x16xi32>
    %32 = arith.cmpi sge, %29, %31 : vector<2x16xi32>
    %c8_i32_13 = arith.constant 8 : i32
    %33 = vector.broadcast %c8_i32_13 : i32 to vector<2x16xi32>
    %34 = arith.addi %31, %33 : vector<2x16xi32>
    %35 = arith.cmpi slt, %29, %34 : vector<2x16xi32>
    %36 = arith.andi %32, %35 : vector<2x16xi1>
    %cst_14 = arith.constant 0.0833333358 : f32
    %cst_15 = arith.constant 0.000000e+00 : f32
    %37 = vector.broadcast %cst_14 : f32 to vector<2x16xf32>
    %38 = vector.broadcast %cst_15 : f32 to vector<2x16xf32>
    %39 = arith.select %36, %37, %38 : vector<2x16xi1>, vector<2x16xf32>
    %c0_16 = arith.constant 0 : index
    %c0_17 = arith.constant 0 : index
    %40 = vector.load %arg1[%c0_16, %c0_17] : memref<16x48xf32, #tpu.memory_space<vmem>>, vector<16x48xf32>
    %cst_18 = arith.constant dense<0.000000e+00> : vector<2x48xf32>
    %41 = tpu.matmul %39, %40, %cst_18 {dimension_numbers = #tpu.dot_dimension_numbers<[1], [0], [0], [1], [0, 0, 1, 1], [], []>} : vector<2x16xf32>, vector<16x48xf32>, vector<2x48xf32> -> vector<2x48xf32>
    %c0_19 = arith.constant 0 : index
    %c0_20 = arith.constant 0 : index
    %42 = vector.load %arg3[%c0_19, %c0_20] : memref<48x128xf32, #tpu.memory_space<vmem>>, vector<48x128xf32>
    %cst_21 = arith.constant dense<0.000000e+00> : vector<2x128xf32>
    %43 = tpu.matmul %41, %42, %cst_21 {dimension_numbers = #tpu.dot_dimension_numbers<[1], [0], [0], [1], [0, 0, 1, 1], [], []>} : vector<2x48xf32>, vector<48x128xf32>, vector<2x128xf32> -> vector<2x128xf32>
    %c0_22 = arith.constant 0 : index
    %c0_23 = arith.constant 0 : index
    %44 = vector.load %arg5[%c0_22, %c0_23] : memref<1x128xf32, #tpu.memory_space<vmem>>, vector<1x128xf32>
    %45 = vector.broadcast %44 : vector<1x128xf32> to vector<2x128xf32>
    %46 = arith.addf %43, %45 : vector<2x128xf32>
    %47 = arith.mulf %46, %46 : vector<2x128xf32>
    %cst_24 = arith.constant dense<0.000000e+00> : vector<2xf32>
    %48 = vector.multi_reduction <add>, %47, %cst_24 [1] : vector<2x128xf32> to vector<2xf32>
    %49 = vector.shape_cast %48 : vector<2xf32> to vector<2x1xf32>
    %cst_25 = arith.constant 9.99999996E-13 : f32
    %50 = vector.broadcast %cst_25 : f32 to vector<2x1xf32>
    %51 = arith.addf %49, %50 : vector<2x1xf32>
    %52 = math.rsqrt %51 : vector<2x1xf32>
    %53 = vector.broadcast %52 : vector<2x1xf32> to vector<2x128xf32>
    %54 = arith.mulf %46, %53 : vector<2x128xf32>
    %c0_26 = arith.constant 0 : index
    %c0_27 = arith.constant 0 : index
    %55 = vector.load %arg7[%c0_26, %c0_27] : memref<2x128xf32, #tpu.memory_space<vmem>>, vector<2x128xf32>
    tpu.vector_store %arg7[%c0_26, %c0_27], %54 {strides = array<i32>} : memref<2x128xf32, #tpu.memory_space<vmem>>, vector<2x128xf32>,
    return
  }
}

</mosaic_0001>

<llo_original>
// kernel: tpu_custom_call.1
$region0: #{tpu_custom_call.1}
  #allocation0 [shape = 'u32[]', space=smem, size = 0x4, offset = 0x4, fixed_abs, tag = 'smem constant byte address 0x4 - core index']
  #allocation1 [shape = 'u32[72,128]{1,0:T(1,128)}', space=vmem, size = 0x9000, scoped, tag = 'internal scratch']
  %s0 = inlined_call_operand.hbm [shape: f32[8,192], index: 0, kind: input, shape index: {}]
  %s1 = inlined_call_operand.hbm [shape: f32[16,48], index: 1, kind: input, shape index: {}]
  %s2 = inlined_call_operand.hbm [shape: f32[192,128], index: 2, kind: input, shape index: {}]
  %s3 = inlined_call_operand.hbm [shape: f32[48,128], index: 3, kind: input, shape index: {}]
  %s4 = inlined_call_operand.vmem [shape: f32[1,128], index: 4, kind: input, shape index: {}]
  %s5 = inlined_call_operand.vmem [shape: f32[1,128], index: 5, kind: input, shape index: {}]
  %s6 = inlined_call_operand.hbm [shape: f32[2,128], index: 6, kind: output, shape index: {0}]
  %s7 = inlined_call_operand.hbm [shape: f32[2,128], index: 7, kind: output, shape index: {1}]
  %8 = xla_tuple %s6, %s7
  %s9 = sld [smem:[#allocation0]]
  $region58: #{tpu_custom_call.1} parent=0
    _
  %s11 = ssub.s32 1, %s9
  %s12 = scalar_select 0, %s11, %s9
  $region1: #{tpu_custom_call.1} parent=0
    #allocation2 [shape = 'u8[8192]{0}', space=vmem, size = 0x2000, scoped, tag = 'input window, operand 0, single buffered']
    #allocation3 [shape = 's32[1]{0}', space=sflag, size = 0x4, scoped, tag = 'scoped memory for tpu_custom_call.1']
    #allocation4 [shape = 's32[1]{0}', space=sflag, size = 0x4, scoped, tag = 'scoped memory for tpu_custom_call.1']
    #allocation5 [shape = 'u8[8192]{0}', space=vmem, size = 0x2000, scoped, tag = 'input window, operand 1, single buffered']
    #allocation6 [shape = 's32[1]{0}', space=sflag, size = 0x4, scoped, tag = 'scoped memory for tpu_custom_call.1']
    #allocation7 [shape = 'u8[98304]{0}', space=vmem, size = 0x18000, scoped, tag = 'input window, operand 2, single buffered']
    #allocation8 [shape = 'u8[24576]{0}', space=vmem, size = 0x6000, scoped, tag = 'input window, operand 3, single buffered']
    #allocation9 [shape = 's32[1]{0}', space=sflag, size = 0x4, scoped, tag = 'scoped memory for tpu_custom_call.1']
    #allocation10 [shape = 'u8[1024]{0}', space=vmem, size = 0x400, scoped, tag = 'output window, operand 0, single buffered']
    #allocation11 [shape = 'u8[1024]{0}', space=vmem, size = 0x400, scoped, tag = 'output window, operand 1, single buffered']
    #allocation12 [shape = 's32[1]{0}', space=sflag, size = 0x4, scoped, tag = 'scoped memory for tpu_custom_call.1']
    %13 = vsyncpa [#allocation3], 0
    %14 = vsyncpa [#allocation6], 0
    %15 = vsyncpa [#allocation9], 0
    %16 = vsyncpa [#allocation4], 0
    %17 = vsyncpa [#allocation12], 0
    // Predicated region
    $region2: #{tpu_custom_call.1} parent=1 // pred_check
      _
    $region3: #{tpu_custom_call.1} parent=1 // pred_check_branch
      %19 = sbr.rel (0) target = $region5
    $region4: #{tpu_custom_call.1} parent=1 // pred_region
      %21 = vsyncadd [#allocation3], 0
      %s23 = sshll.u32 %s0, 4
      %s24 = int_to_ptr.hbm [resolvable:$true] %s23
      %s25 = sshll.u32 [#allocation2], 4
      %s26 = int_to_ptr.vmem [resolvable:$true] %s25
      %28 = dma.hbm_to_vmem [thread:$0]  %s24, 256, %s26, [#allocation3]
    $region5: #{tpu_custom_call.1} parent=1 // pred_fallthru
      _
    // Predicated region
    $region6: #{tpu_custom_call.1} parent=1 // pred_check
      _
    $region7: #{tpu_custom_call.1} parent=1 // pred_check_branch
      %30 = sbr.rel (0) target = $region9
    $region8: #{tpu_custom_call.1} parent=1 // pred_region
      %32 = vsyncadd [#allocation6], 0
      %s33 = sshll.u32 %s1, 4
      %s34 = int_to_ptr.hbm [resolvable:$true] %s33
      %s35 = sshll.u32 [#allocation5], 4
      %s36 = int_to_ptr.vmem [resolvable:$true] %s35
      %41 = dma.hbm_to_vmem [thread:$0]  %s34, 256, %s36, [#allocation6], 128, 128, 8
    $region9: #{tpu_custom_call.1} parent=1 // pred_fallthru
      _
    // Predicated region
    $region10: #{tpu_custom_call.1} parent=1 // pred_check
      _
    $region11: #{tpu_custom_call.1} parent=1 // pred_check_branch
      %43 = sbr.rel (0) target = $region13
    $region12: #{tpu_custom_call.1} parent=1 // pred_region
      %45 = vsyncadd [#allocation6], 0
      %s46 = sshll.u32 %s2, 4
      %s47 = int_to_ptr.hbm [resolvable:$true] %s46
      %s48 = sshll.u32 [#allocation7], 4
      %s49 = int_to_ptr.vmem [resolvable:$true] %s48
      %54 = dma.hbm_to_vmem [thread:$0]  %s47, 3072, %s49, [#allocation6], 128, 128, 8
    $region13: #{tpu_custom_call.1} parent=1 // pred_fallthru
      _
    // Predicated region
    $region14: #{tpu_custom_call.1} parent=1 // pred_check
      _
    $region15: #{tpu_custom_call.1} parent=1 // pred_check_branch
      %56 = sbr.rel (0) target = $region17
    $region16: #{tpu_custom_call.1} parent=1 // pred_region
      %58 = vsyncadd [#allocation9], 0
      %s59 = sshll.u32 %s3, 4
      %s60 = int_to_ptr.hbm [resolvable:$true] %s59
      %s61 = sshll.u32 [#allocation8], 4
      %s62 = int_to_ptr.vmem [resolvable:$true] %s61
      %67 = dma.hbm_to_vmem [thread:$0]  %s60, 768, %s62, [#allocation9], 128, 128, 8
    $region17: #{tpu_custom_call.1} parent=1 // pred_fallthru
      _
    // Predicated region
    $region18: #{tpu_custom_call.1} parent=1 // pred_check
      _
    $region19: #{tpu_custom_call.1} parent=1 // pred_check_branch
      %69 = sbr.rel (0) target = $region21
    $region20: #{tpu_custom_call.1} parent=1 // pred_region
      _
    $region21: #{tpu_custom_call.1} parent=1 // pred_fallthru
      _
    // Predicated region
    $region22: #{tpu_custom_call.1} parent=1 // pred_check
      _
    $region23: #{tpu_custom_call.1} parent=1 // pred_check_branch
      %71 = sbr.rel (0) target = $region25
    $region24: #{tpu_custom_call.1} parent=1 // pred_region
      _
    $region25: #{tpu_custom_call.1} parent=1 // pred_fallthru
      _
    // Predicated region
    $region26: #{tpu_custom_call.1} parent=1 // pred_check
      _
    $region27: #{tpu_custom_call.1} parent=1 // pred_check_branch
      %73 = sbr.rel (0) target = $region29
    $region28: #{tpu_custom_call.1} parent=1 // pred_region
      %75 = dma.done [#allocation3], 256
    $region29: #{tpu_custom_call.1} parent=1 // pred_fallthru
      _
    // Predicated region
    $region30: #{tpu_custom_call.1} parent=1 // pred_check
      _
    $region31: #{tpu_custom_call.1} parent=1 // pred_check_branch
      %77 = sbr.rel (0) target = $region33
    $region32: #{tpu_custom_call.1} parent=1 // pred_region
      %79 = dma.done [#allocation6], 256
    $region33: #{tpu_custom_call.1} parent=1 // pred_fallthru
      _
    // Predicated region
    $region34: #{tpu_custom_call.1} parent=1 // pred_check
      _
    $region35: #{tpu_custom_call.1} parent=1 // pred_check_branch
      %81 = sbr.rel (0) target = $region37
    $region36: #{tpu_custom_call.1} parent=1 // pred_region
      %83 = dma.done [#allocation6], 3072
    $region37: #{tpu_custom_call.1} parent=1 // pred_fallthru
      _
    // Predicated region
    $region38: #{tpu_custom_call.1} parent=1 // pred_check
      _
    $region39: #{tpu_custom_call.1} parent=1 // pred_check_branch
      %85 = sbr.rel (0) target = $region41
    $region40: #{tpu_custom_call.1} parent=1 // pred_region
      %87 = dma.done [#allocation9], 768
    $region41: #{tpu_custom_call.1} parent=1 // pred_fallthru
      _
    %v88 = vlaneseq
    %v89 = vshrl.u32 %v88, 7
    %v90 = vlaneseq
    %v91 = vand.u32 %v90, 127
    %v92 = vmul.u32 %v89, 4
    %vm93 = vcmp.ge.s32.totalorder %v91, %v92
    %v94 = vadd.s32 %v92, 4
    %vm95 = vcmp.lt.s32.totalorder %v91, %v94
    %vm96 = vmand %vm93, %vm95
    %v97 = vsel %vm96, 0.125, 0.0
    %v98 = vld [vmem:[#allocation2] sm:$0xff]
    %v99 = vld [vmem:[#allocation2 + $0x8] sm:$0xff]
    %vm100 = vcmask 64512
    %v102 = vsel %vm100, %v97, 0
    %104 = vmatpush.msra.mxu0 0.0
    %105 = vmatpush.msra.mxu0 0.0
    %106 = vmatpush.msra.mxu0 0.0
    %107 = vmatpush.msra.mxu0 0.0
    %108 = vmatpush.msra.mxu0 0.0
    %109 = vmatpush.msra.mxu0 0.0
    %110 = vmatpush.msra.mxu0 0.0
    %111 = vmatpush.msra.mxu0 0.0
    %112 = vmatpush.msra.mxu0 0.0
    %113 = vmatpush.msra.mxu0 0.0
    %114 = vmatpush.msra.mxu0 0.0
    %115 = vmatpush.msra.mxu0 0.0
    %116 = vmatpush.msra.mxu0 0.0
    %117 = vmatpush.msra.mxu0 0.0
    %118 = vmatpush.msra.mxu0 0.0
    %119 = vmatpush.msra.mxu0 %v98
    %120 = vmatmul.f32.gmra.mxu0 %v102
    %v121 = vpop.f32.mrf.mxu0
    %v122 = vadd.f32 0.0, %v121
    %123 = vdwg.mxu0
    %124 = vmatpush.msra.mxu0 0.0
    %125 = vmatpush.msra.mxu0 0.0
    %126 = vmatpush.msra.mxu0 0.0
    %127 = vmatpush.msra.mxu0 0.0
    %128 = vmatpush.msra.mxu0 0.0
    %129 = vmatpush.msra.mxu0 0.0
    %130 = vmatpush.msra.mxu0 0.0
    %131 = vmatpush.msra.mxu0 0.0
    %132 = vmatpush.msra.mxu0 0.0
    %133 = vmatpush.msra.mxu0 0.0
    %134 = vmatpush.msra.mxu0 0.0
    %135 = vmatpush.msra.mxu0 0.0
    %136 = vmatpush.msra.mxu0 0.0
    %137 = vmatpush.msra.mxu0 0.0
    %138 = vmatpush.msra.mxu0 0.0
    %139 = vmatpush.msra.mxu0 %v99
    %140 = vmatmul.f32.gmra.mxu0 %v102
    %v141 = vpop.f32.mrf.mxu0
    %v142 = vadd.f32 0.0, %v141
    %143 = vdwg.mxu0
    %v144 = vld [vmem:[#allocation7] sm:$0xff]
    %v145 = vld [vmem:[#allocation7 + $0x8] sm:$0xff]
    %v146 = vld [vmem:[#allocation7 + $0x10] sm:$0xff]
    %v147 = vld [vmem:[#allocation7 + $0x18] sm:$0xff]
    %v148 = vld [vmem:[#allocation7 + $0x20] sm:$0xff]
    %v149 = vld [vmem:[#allocation7 + $0x28] sm:$0xff]
    %v150 = vld [vmem:[#allocation7 + $0x30] sm:$0xff]
    %v151 = vld [vmem:[#allocation7 + $0x38] sm:$0xff]
    %v152 = vld [vmem:[#allocation7 + $0x40] sm:$0xff]
    %v153 = vld [vmem:[#allocation7 + $0x48] sm:$0xff]
    %v154 = vld [vmem:[#allocation7 + $0x50] sm:$0xff]
    %v155 = vld [vmem:[#allocation7 + $0x58] sm:$0xff]
    %v156 = vld [vmem:[#allocation7 + $0x60] sm:$0xff]
    %v157 = vld [vmem:[#allocation7 + $0x68] sm:$0xff]
    %v158 = vld [vmem:[#allocation7 + $0x70] sm:$0xff]
    %v159 = vld [vmem:[#allocation7 + $0x78] sm:$0xff]
    %v160 = vld [vmem:[#allocation7 + $0x80] sm:$0xff]
    %v161 = vld [vmem:[#allocation7 + $0x88] sm:$0xff]
    %v162 = vld [vmem:[#allocation7 + $0x90] sm:$0xff]
    %v163 = vld [vmem:[#allocation7 + $0x98] sm:$0xff]
    %v164 = vld [vmem:[#allocation7 + $0xa0] sm:$0xff]
    %v165 = vld [vmem:[#allocation7 + $0xa8] sm:$0xff]
    %v166 = vld [vmem:[#allocation7 + $0xb0] sm:$0xff]
    %v167 = vld [vmem:[#allocation7 + $0xb8] sm:$0xff]
    %v168 = vld [vmem:[%s4] sm:$0x1]
    %v170 = vperm.slane %v168, 0
    %vm172 = vcmask 523264
    %v174 = vsel %vm172, %v142, 0
    %176 = vmatpush.msra.mxu0 %v159
    %177 = vmatpush.msra.mxu0 %v158
    %178 = vmatpush.msra.mxu0 %v157
    %179 = vmatpush.msra.mxu0 %v156
    %180 = vmatpush.msra.mxu0 %v155
    %181 = vmatpush.msra.mxu0 %v154
    %182 = vmatpush.msra.mxu0 %v153
    %183 = vmatpush.msra.mxu0 %v152
    %184 = vmatpush.msra.mxu0 %v151
    %185 = vmatpush.msra.mxu0 %v150
    %186 = vmatpush.msra.mxu0 %v149
    %187 = vmatpush.msra.mxu0 %v148
    %188 = vmatpush.msra.mxu0 %v147
    %189 = vmatpush.msra.mxu0 %v146
    %190 = vmatpush.msra.mxu0 %v145
    %191 = vmatpush.msra.mxu0 %v144
    %192 = vmatmul.f32.gmra.mxu0 %v122
    %v193 = vpop.f32.mrf.mxu0
    %v194 = vadd.f32 %v170, %v193
    %195 = vdwg.mxu0
    %196 = vmatpush.msra.mxu0 0.0
    %197 = vmatpush.msra.mxu0 0.0
    %198 = vmatpush.msra.mxu0 0.0
    %199 = vmatpush.msra.mxu0 0.0
    %200 = vmatpush.msra.mxu0 0.0
    %201 = vmatpush.msra.mxu0 0.0
    %202 = vmatpush.msra.mxu0 0.0
    %203 = vmatpush.msra.mxu0 0.0
    %204 = vmatpush.msra.mxu0 %v167
    %205 = vmatpush.msra.mxu0 %v166
    %206 = vmatpush.msra.mxu0 %v165
    %207 = vmatpush.msra.mxu0 %v164
    %208 = vmatpush.msra.mxu0 %v163
    %209 = vmatpush.msra.mxu0 %v162
    %210 = vmatpush.msra.mxu0 %v161
    %211 = vmatpush.msra.mxu0 %v160
    %212 = vmatmul.f32.gmra.mxu0 %v174
    %v213 = vpop.f32.mrf.mxu0
    %v214 = vadd.f32 %v194, %v213
    %215 = vdwg.mxu0
    %v216 = vmul.f32 %v214, %v214
    %vm217 = vcmask 1041408
    %v218 = vsel %vm217, %v216, 0.0
    %219 = vadd.xlane.f32.xlu0 %v218
    %v220 = vpop.xlane.xlu0 %219
    %v221 = vadd.f32 %v220, 1e-12
    %v222 = vrsqrt.pop %v221
    %v223 = vmul.f32 %v222, %v221
    %v224 = vmul.f32 %v223, %v222
    %v225 = vmul.f32 0.5, %v224
    %v226 = vsub.f32 1.5, %v225
    %v227 = vmul.f32 %v222, %v226
    %vm228 = vweird.f32 %v221
    %vm229 = vweird.f32 %v222
    %vm230 = vmor %vm228, %vm229
    %v231 = vsel %vm230, %v222, %v227
    %v232 = vmul.f32 %v214, %v231
    %233 = vst [vmem:[#allocation10] sm:$0x3] %v232
    %v234 = vmul.u32 %v89, 8
    %vm235 = vcmp.ge.s32.totalorder %v91, %v234
    %v236 = vadd.s32 %v234, 8
    %vm237 = vcmp.lt.s32.totalorder %v91, %v236
    %vm238 = vmand %vm235, %vm237
    %v239 = vsel %vm238, 0.083333336, 0.0
    %v240 = vld [vmem:[#allocation5] sm:$0xff]
    %v241 = vld [vmem:[#allocation5 + $0x8] sm:$0xff]
    %vm242 = vcmask 130048
    %v244 = vsel %vm242, %v239, 0
    %246 = vmatpush.msra.mxu0 0.0
    %247 = vmatpush.msra.mxu0 0.0
    %248 = vmatpush.msra.mxu0 0.0
    %249 = vmatpush.msra.mxu0 0.0
    %250 = vmatpush.msra.mxu0 0.0
    %251 = vmatpush.msra.mxu0 0.0
    %252 = vmatpush.msra.mxu0 0.0
    %253 = vmatpush.msra.mxu0 0.0
    %254 = vmatpush.msra.mxu0 0.0
    %255 = vmatpush.msra.mxu0 0.0
    %256 = vmatpush.msra.mxu0 0.0
    %257 = vmatpush.msra.mxu0 0.0
    %258 = vmatpush.msra.mxu0 0.0
    %259 = vmatpush.msra.mxu0 0.0
    %260 = vmatpush.msra.mxu0 %v241
    %261 = vmatpush.msra.mxu0 %v240
    %262 = vmatmul.f32.gmra.mxu0 %v244
    %v263 = vpop.f32.mrf.mxu0
    %v264 = vadd.f32 0.0, %v263
    %265 = vdwg.mxu0
    %v266 = vld [vmem:[#allocation8] sm:$0xff]
    %v267 = vld [vmem:[#allocation8 + $0x8] sm:$0xff]
    %v268 = vld [vmem:[#allocation8 + $0x10] sm:$0xff]
    %v269 = vld [vmem:[#allocation8 + $0x18] sm:$0xff]
    %v270 = vld [vmem:[#allocation8 + $0x20] sm:$0xff]
    %v271 = vld [vmem:[#allocation8 + $0x28] sm:$0xff]
    %v272 = vld [vmem:[%s5] sm:$0x1]
    %v274 = vperm.slane %v272, 0
    %vm276 = vcmask 392192
    %v278 = vsel %vm276, %v264, 0
    %280 = vmatpush.msra.mxu0 0.0
    %281 = vmatpush.msra.mxu0 0.0
    %282 = vmatpush.msra.mxu0 0.0
    %283 = vmatpush.msra.mxu0 0.0
    %284 = vmatpush.msra.mxu0 0.0
    %285 = vmatpush.msra.mxu0 0.0
    %286 = vmatpush.msra.mxu0 0.0
    %287 = vmatpush.msra.mxu0 0.0
    %288 = vmatpush.msra.mxu0 0.0
    %289 = vmatpush.msra.mxu0 0.0
    %290 = vmatpush.msra.mxu0 %v271
    %291 = vmatpush.msra.mxu0 %v270
    %292 = vmatpush.msra.mxu0 %v269
    %293 = vmatpush.msra.mxu0 %v268
    %294 = vmatpush.msra.mxu0 %v267
    %295 = vmatpush.msra.mxu0 %v266
    %296 = vmatmul.f32.gmra.mxu0 %v278
    %v297 = vpop.f32.mrf.mxu0
    %v298 = vadd.f32 %v274, %v297
    %299 = vdwg.mxu0
    %v300 = vmul.f32 %v298, %v298
    %v301 = vsel %vm217, %v300, 0.0
    %302 = vadd.xlane.f32.xlu0 %v301
    %v303 = vpop.xlane.xlu0 %302
    %v304 = vadd.f32 %v303, 1e-12
    %v305 = vrsqrt.pop %v304
    %v306 = vmul.f32 %v305, %v304
    %v307 = vmul.f32 %v306, %v305
    %v308 = vmul.f32 0.5, %v307
    %v309 = vsub.f32 1.5, %v308
    %v310 = vmul.f32 %v305, %v309
    %vm311 = vweird.f32 %v304
    %vm312 = vweird.f32 %v305
    %vm313 = vmor %vm311, %vm312
    %v314 = vsel %vm313, %v305, %v310
    %v315 = vmul.f32 %v298, %v314
    %316 = vst [vmem:[#allocation11] sm:$0x3] %v315
    // Predicated region
    $region42: #{tpu_custom_call.1} parent=1 // pred_check
      _
    $region43: #{tpu_custom_call.1} parent=1 // pred_check_branch
      %318 = sbr.rel (0) target = $region45
    $region44: #{tpu_custom_call.1} parent=1 // pred_region
      %320 = vsyncadd [#allocation4], 0
      %s322 = sshll.u32 [#allocation10], 4
      %s323 = int_to_ptr.vmem [resolvable:$true] %s322
      %s324 = sshll.u32 %s6, 4
      %s325 = int_to_ptr.hbm [resolvable:$true] %s324
      %327 = dma.vmem_to_hbm [thread:$0]  %s323, 32, %s325, [#allocation4]
    $region45: #{tpu_custom_call.1} parent=1 // pred_fallthru
      _
    // Predicated region
    $region46: #{tpu_custom_call.1} parent=1 // pred_check
      _
    $region47: #{tpu_custom_call.1} parent=1 // pred_check_branch
      %329 = sbr.rel (0) target = $region49
    $region48: #{tpu_custom_call.1} parent=1 // pred_region
      %331 = vsyncadd [#allocation12], 0
      %s333 = sshll.u32 [#allocation11], 4
      %s334 = int_to_ptr.vmem [resolvable:$true] %s333
      %s335 = sshll.u32 %s7, 4
      %s336 = int_to_ptr.hbm [resolvable:$true] %s335
      %338 = dma.vmem_to_hbm [thread:$0]  %s334, 32, %s336, [#allocation12]
    $region49: #{tpu_custom_call.1} parent=1 // pred_fallthru
      _
    // Predicated region
    $region50: #{tpu_custom_call.1} parent=1 // pred_check
      _
    $region51: #{tpu_custom_call.1} parent=1 // pred_check_branch
      %340 = sbr.rel (0) target = $region53
    $region52: #{tpu_custom_call.1} parent=1 // pred_region
      %342 = dma.done [#allocation4], 32
    $region53: #{tpu_custom_call.1} parent=1 // pred_fallthru
      _
    // Predicated region
    $region54: #{tpu_custom_call.1} parent=1 // pred_check
      _
    $region55: #{tpu_custom_call.1} parent=1 // pred_check_branch
      %344 = sbr.rel (0) target = $region57
    $region56: #{tpu_custom_call.1} parent=1 // pred_region
      %346 = dma.done [#allocation12], 32
    $region57: #{tpu_custom_call.1} parent=1 // pred_fallthru
      _
    %347 = vsyncpa [#allocation3], 1
    %348 = vsyncpa [#allocation6], 1
    %349 = vsyncpa [#allocation9], 1
    %350 = vsyncpa [#allocation4], 1
    %351 = vsyncpa [#allocation12], 1

</llo_original>
